<compile_context>
chip_gen: v5e
topology: v5e:2x2
jax: 0.10.0
libtpu: 0.0.40
codegen_flags: <defaults>
</compile_context>

<pallas_src>
import functools

import jax
import jax.numpy as jnp
from jax import lax
from jax.experimental import pallas as pl
from jax.experimental.pallas import tpu as pltpu


def _round_up(x: int, m: int) -> int:
    return (x + m - 1) // m * m


@functools.lru_cache(maxsize=None)
def _vmem_limit_bytes() -> int:
    """Scoped VMEM limit: ~75% of physical, capped at 96 MiB.

    v5e/v6e (128 MiB physical) -> 96 MiB; v7x (64 MiB per TC) -> 48 MiB.
    Falls back to the most conservative (v7x) figure if the query fails.
    """
    try:
        phys = int(pltpu.get_tpu_info().vmem_capacity_bytes)
    except Exception:
        phys = 64 * 1024 * 1024
    return min(phys * 3 // 4, 96 * 1024 * 1024)


def _divisor_tiles(dim_al: int, unit: int, cap: int):
    """Multiples of `unit` that divide `dim_al`, up to `cap` (ascending)."""
    hi = min(cap, dim_al)
    cands = [d for d in range(unit, hi + 1, unit) if dim_al % d == 0]
    return cands if cands else [hi]


def _choose_tiles(m_al: int, n_al: int, k_al: int, in_bytes: int, budget: int):
    """Pick (tm, tn, tk): aligned, dividing the aligned dims, filling the budget."""

    def footprint(tm, tn, tk):
        # Double-buffered X / W^T / bias input tiles + double-buffered f32 out tile.
        return 2 * (tm * tk + tn * tk + tn) * in_bytes + 2 * tm * tn * 4

    # M tile: cover all of M in the small-batch regime, cap at 512 otherwise.
    tm = max(_divisor_tiles(m_al, 8, 512))
    # N tile: when M fits one tile the kernel is weight-streaming bound, so let
    # the weight panel be wider; otherwise 512 keeps X-reuse balanced.
    tn_cap = 1024 if tm == m_al else 512
    tn = max(_divisor_tiles(n_al, 128, tn_cap))
    # K tile: as deep as the budget allows (fewer grid steps, less accumulator
    # read-modify-write), capped at 2048.
    tk = 128
    for cand in _divisor_tiles(k_al, 128, 2048):
        if footprint(tm, tn, cand) <= budget:
            tk = max(tk, cand)
    # Safety shrink for very small budgets (never triggers at >=36 MiB).
    while footprint(tm, tn, tk) > budget and tn > 128:
        tn = max(_divisor_tiles(n_al, 128, max(128, tn // 2)))
    while footprint(tm, tn, tk) > budget and tm > 8:
        tm = max(_divisor_tiles(m_al, 8, max(8, tm // 2)))
    return tm, tn, tk


def _pad_to(arr, shape):
    pads = tuple((0, t - s) for s, t in zip(arr.shape, shape))
    if all(p == (0, 0) for p in pads):
        return arr
    return jnp.pad(arr, pads)


def _linear_kernel_single(x_ref, w_ref, b_ref, o_ref):
    """Whole problem in one block: out = X @ W.T + b (W in native (N, K) layout)."""
    o_ref[...] = (
        lax.dot_general(
            x_ref[...],
            w_ref[...],
            dimension_numbers=(((1,), (1,)), ((), ())),
            preferred_element_type=jnp.float32,
        )
        + b_ref[...]
    )


def _linear_kernel_tiled(x_ref, wt_ref, b_ref, o_ref):
    """(tm, tn) output tile, accumulated in-place over the K grid axis.

    x_ref:  (tm, tk)  activation tile
    wt_ref: (tk, tn)  K-major weight tile (pre-transposed once in the wrapper,
                      so the inner loop is a plain MXU matmul, no XLU transpose)
    b_ref:  (1, tn)   f32 bias tile
    o_ref:  (tm, tn)  f32 output tile, doubles as the accumulator
    """
    k = pl.program_id(2)

    @pl.when(k == 0)
    def _():
        o_ref[...] = jnp.zeros_like(o_ref)

    o_ref[...] += jnp.dot(
        x_ref[...], wt_ref[...], preferred_element_type=jnp.float32
    )

    @pl.when(k == pl.num_programs(2) - 1)
    def _():
        # Bias add only in the epilogue, off the hot K loop.
        o_ref[...] += b_ref[...]


@functools.partial(jax.jit, static_argnames=("compute_dtype",))
def linear_layer_forward(x, weight, bias, compute_dtype=None):
    """Pallas equivalent of nn.Linear(in_dim, out_dim)(x).

    x:      (batch, in_dim)
    weight: (out_dim, in_dim)  -- native PyTorch layout
    bias:   (out_dim,)
    compute_dtype: optional MXU operand dtype (e.g. jnp.bfloat16 on v6e/v7x for
        higher MXU throughput and half the weight DMA). Accumulation, bias and
        the output stay float32.
    """
    m, k = x.shape
    n, k2 = weight.shape
    assert k == k2, "weight must be (out_dim, in_dim)"

    cdt = jnp.dtype(compute_dtype) if compute_dtype is not None else jnp.dtype(x.dtype)
    in_bytes = cdt.itemsize

    m_al = _round_up(m, 8)
    n_al = _round_up(n, 128)
    k_al = _round_up(k, 128)

    limit = _vmem_limit_bytes()
    budget = limit * 3 // 4  # headroom for compiler-internal scratch

    tm, tn, tk = _choose_tiles(m_al, n_al, k_al, in_bytes, budget)
    grid = (m_al // tm, n_al // tn, k_al // tk)

    x_c = x.astype(cdt)
    w_c = weight.astype(cdt)
    b_p = _pad_to(bias.astype(jnp.float32).reshape(1, n), (1, n_al))

    if grid == (1, 1, 1):
        # Tiny-problem fast path: single block, no K reduction / accumulator,
        # no weight transpose -- W is swept exactly once in native layout.
        x_p = _pad_to(x_c, (m_al, k_al))
        w_p = _pad_to(w_c, (n_al, k_al))
        out = pl.pallas_call(
            _linear_kernel_single,
            out_shape=jax.ShapeDtypeStruct((m_al, n_al), jnp.float32),
            grid_spec=pltpu.PrefetchScalarGridSpec(
                num_scalar_prefetch=0,
                grid=(1,),
                in_specs=[
                    pl.BlockSpec((m_al, k_al), lambda i: (0, 0)),   # X
                    pl.BlockSpec((n_al, k_al), lambda i: (0, 0)),   # W (native)
                    pl.BlockSpec((1, n_al), lambda i: (0, 0)),      # bias
                ],
                out_specs=pl.BlockSpec((m_al, n_al), lambda i: (0, 0)),
            ),
            compiler_params=pltpu.CompilerParams(
                dimension_semantics=("arbitrary",),
                vmem_limit_bytes=limit,
            ),
        )(x_p, w_p, b_p)
        return out[:m, :n]

    # Tiled path: pre-transpose W once to K-major (one-time HBM pass, amortized
    # over all M/tm reuses of each weight panel; keeps the K inner loop a plain
    # (M,K)x(K,N) MXU matmul with no in-loop XLU transpose).
    x_p = _pad_to(x_c, (m_al, k_al))
    wt_p = _pad_to(w_c.T, (k_al, n_al))
    # TODO(synk): for K/N far from 128-alignment, mask the boundary tile
    # in-kernel (broadcasted_iota >= K) instead of zero-padding the weight.

    cost = pl.CostEstimate(
        flops=2 * m_al * k_al * n_al,
        transcendentals=0,
        # Honest re-streaming model: X read grid_n times, W read grid_m times.
        bytes_accessed=(
            in_bytes * (m_al * k_al * grid[1] + n_al * k_al * grid[0])
            + 4 * (m_al * n_al + n_al)
        ),
    )

    out = pl.pallas_call(
        _linear_kernel_tiled,
        out_shape=jax.ShapeDtypeStruct((m_al, n_al), jnp.float32),
        grid_spec=pltpu.PrefetchScalarGridSpec(
            num_scalar_prefetch=0,
            grid=grid,
            in_specs=[
                pl.BlockSpec((tm, tk), lambda i, j, kk: (i, kk)),   # X
                pl.BlockSpec((tk, tn), lambda i, j, kk: (kk, j)),   # W^T (K-major)
                pl.BlockSpec((1, tn), lambda i, j, kk: (0, j)),     # bias
            ],
            out_specs=pl.BlockSpec((tm, tn), lambda i, j, kk: (i, j)),
        ),
        compiler_params=pltpu.CompilerParams(
            # M, N shard across TensorCores on v7x; K is the reduction axis.
            dimension_semantics=("parallel", "parallel", "arbitrary"),
            vmem_limit_bytes=limit,
        ),
        cost_estimate=cost,
    )(x_p, wt_p, b_p)

    return out[:m, :n]


if __name__ == "__main__":
    key = jax.random.PRNGKey(0)
    k_x, k_w, k_b, k_x2, k_w2, k_b2 = jax.random.split(key, 6)

    # --- LinearLayer(input_dimension=64, output_dimension=16), batch of 8 ---
    # (perfect-square dims as LayerCoordinates expects; it never touches forward)
    batch, in_dim, out_dim = 8, 64, 16
    bound = 1.0 / jnp.sqrt(jnp.float32(in_dim))
    x = jax.random.normal(k_x, (batch, in_dim), dtype=jnp.float32)
    w = jax.random.uniform(k_w, (out_dim, in_dim), minval=-bound, maxval=bound,
                           dtype=jnp.float32)
    b = jax.random.uniform(k_b, (out_dim,), minval=-bound, maxval=bound,
                           dtype=jnp.float32)

    out = jax.block_until_ready(linear_layer_forward(x, w, b))
    ref = x @ w.T + b
    assert out.shape == (batch, out_dim)
    assert jnp.allclose(out, ref, atol=1e-5, rtol=1e-5)

    # --- larger shape: exercises the tiled, K-accumulating path (grid 1x2x2) ---
    m2, k2, n2 = 256, 4096, 1536
    bound2 = 1.0 / jnp.sqrt(jnp.float32(k2))
    x2 = jax.random.normal(k_x2, (m2, k2), dtype=jnp.float32)
    w2 = jax.random.uniform(k_w2, (n2, k2), minval=-bound2, maxval=bound2,
                            dtype=jnp.float32)
    b2 = jax.random.uniform(k_b2, (n2,), minval=-bound2, maxval=bound2,
                            dtype=jnp.float32)

    out2 = jax.block_until_ready(linear_layer_forward(x2, w2, b2))
    ref2 = jnp.dot(x2, w2.T, precision=lax.Precision.HIGHEST) + b2
    assert out2.shape == (m2, n2)
    assert jnp.allclose(out2, ref2, atol=2e-3, rtol=2e-3)

    # --- bf16 MXU path (v6e/v7x throughput, halved weight DMA), f32 accumulate ---
    out_bf16 = jax.block_until_ready(
        linear_layer_forward(x2, w2, b2, compute_dtype=jnp.bfloat16))
    assert jnp.allclose(out_bf16, ref2, atol=5e-2, rtol=5e-2)

    print("KERNEL_OK")
</pallas_src>

<mosaic_0001>
module attributes {stable_mosaic.version = 11 : i64} {
  func.func @_linear_kernel_single(%arg0: i32, %arg1: memref<8x128xf32, #tpu.memory_space<vmem>>, %arg2: memref<128x128xf32, #tpu.memory_space<vmem>>, %arg3: memref<1x128xf32, #tpu.memory_space<vmem>>, %arg4: memref<8x128xf32, #tpu.memory_space<vmem>>) attributes {dimension_semantics = [#tpu.dimension_semantics<arbitrary>], iteration_bounds = array<i64: 1>, scalar_prefetch = 0 : i64, scratch_operands = 0 : i64, tpu.core_type = #tpu.core_type<tc>, window_params = [{pipeline_mode = #tpu.pipeline_mode<synchronous>, transform_indices = @transform_0, window_bounds = array<i64: 8, 128>}, {pipeline_mode = #tpu.pipeline_mode<synchronous>, transform_indices = @transform_1, window_bounds = array<i64: 128, 128>}, {pipeline_mode = #tpu.pipeline_mode<synchronous>, transform_indices = @transform_2, window_bounds = array<i64: 1, 128>}, {pipeline_mode = #tpu.pipeline_mode<synchronous>, transform_indices = @transform_3, window_bounds = array<i64: 8, 128>}]} {
    %c0 = arith.constant 0 : index
    %c0_0 = arith.constant 0 : index
    %0 = vector.load %arg1[%c0, %c0_0] : memref<8x128xf32, #tpu.memory_space<vmem>>, vector<8x128xf32>
    %c0_1 = arith.constant 0 : index
    %c0_2 = arith.constant 0 : index
    %1 = vector.load %arg2[%c0_1, %c0_2] : memref<128x128xf32, #tpu.memory_space<vmem>>, vector<128x128xf32>
    %cst = arith.constant dense<0.000000e+00> : vector<8x128xf32>
    %2 = tpu.matmul %0, %1, %cst {dimension_numbers = #tpu.dot_dimension_numbers<[1], [1], [0], [0], [0, 0, 1, 0], [], []>} : vector<8x128xf32>, vector<128x128xf32>, vector<8x128xf32> -> vector<8x128xf32>
    %c0_3 = arith.constant 0 : index
    %c0_4 = arith.constant 0 : index
    %3 = vector.load %arg3[%c0_3, %c0_4] : memref<1x128xf32, #tpu.memory_space<vmem>>, vector<1x128xf32>
    %4 = vector.broadcast %3 : vector<1x128xf32> to vector<8x128xf32>
    %5 = arith.addf %2, %4 : vector<8x128xf32>
    %c0_5 = arith.constant 0 : index
    %c0_6 = arith.constant 0 : index
    %6 = vector.load %arg4[%c0_5, %c0_6] : memref<8x128xf32, #tpu.memory_space<vmem>>, vector<8x128xf32>
    tpu.vector_store %arg4[%c0_5, %c0_6], %5 {strides = array<i32>} : memref<8x128xf32, #tpu.memory_space<vmem>>, vector<8x128xf32>,
    return
  }
  func.func @transform_0(%arg0: i32) -> (i32, i32) {
    %c0_i32 = arith.constant 0 : i32
    %c0_i32_0 = arith.constant 0 : i32
    %c0_i32_1 = arith.constant 0 : i32
    return %c0_i32, %c0_i32_0 : i32, i32
  }
  func.func @transform_1(%arg0: i32) -> (i32, i32) {
    %c0_i32 = arith.constant 0 : i32
    %c0_i32_0 = arith.constant 0 : i32
    %c0_i32_1 = arith.constant 0 : i32
    return %c0_i32, %c0_i32_0 : i32, i32
  }
  func.func @transform_2(%arg0: i32) -> (i32, i32) {
    %c0_i32 = arith.constant 0 : i32
    %c0_i32_0 = arith.constant 0 : i32
    %c0_i32_1 = arith.constant 0 : i32
    return %c0_i32, %c0_i32_0 : i32, i32
  }
  func.func @transform_3(%arg0: i32) -> (i32, i32) {
    %c0_i32 = arith.constant 0 : i32
    %c0_i32_0 = arith.constant 0 : i32
    %c0_i32_1 = arith.constant 0 : i32
    return %c0_i32, %c0_i32_0 : i32, i32
  }
}

</mosaic_0001>

<llo_original>
// kernel: linear_layer_forward.1
$region0: #{linear_layer_forward.1}
  #allocation0 [shape = 'u32[]', space=smem, size = 0x4, offset = 0x4, fixed_abs, tag = 'smem constant byte address 0x4 - core index']
  #allocation1 [shape = 'u32[72,128]{1,0:T(1,128)}', space=vmem, size = 0x9000, scoped, tag = 'internal scratch']
  %s0 = inlined_call_operand.vmem [shape: f32[8,128], index: 0, kind: input, shape index: {}]
  %s1 = inlined_call_operand.vmem [shape: f32[128,128], index: 1, kind: input, shape index: {}]
  %s2 = inlined_call_operand.vmem [shape: f32[1,128], index: 2, kind: input, shape index: {}]
  %s3 = inlined_call_operand.hbm [shape: f32[8,128], index: 3, kind: output, shape index: {}]
  %s4 = sld [smem:[#allocation0]]
  $region22: #{linear_layer_forward.1} parent=0
    _
  %s6 = ssub.s32 1, %s4
  %s7 = scalar_select 0, %s6, %s4
  $region1: #{linear_layer_forward.1} parent=0
    #allocation2 [shape = 'u8[4096]{0}', space=vmem, size = 0x1000, scoped, tag = 'output window, operand 0, single buffered']
    #allocation3 [shape = 's32[1]{0}', space=sflag, size = 0x4, scoped, tag = 'scoped memory for linear_layer_forward.1']
    %8 = vsyncpa [#allocation3], 0
    // Predicated region
    $region2: #{linear_layer_forward.1} parent=1 // pred_check
      _
    $region3: #{linear_layer_forward.1} parent=1 // pred_check_branch
      %10 = sbr.rel (0) target = $region5
    $region4: #{linear_layer_forward.1} parent=1 // pred_region
      _
    $region5: #{linear_layer_forward.1} parent=1 // pred_fallthru
      _
    // Predicated region
    $region6: #{linear_layer_forward.1} parent=1 // pred_check
      _
    $region7: #{linear_layer_forward.1} parent=1 // pred_check_branch
      %12 = sbr.rel (0) target = $region9
    $region8: #{linear_layer_forward.1} parent=1 // pred_region
      _
    $region9: #{linear_layer_forward.1} parent=1 // pred_fallthru
      _
    // Predicated region
    $region10: #{linear_layer_forward.1} parent=1 // pred_check
      _
    $region11: #{linear_layer_forward.1} parent=1 // pred_check_branch
      %14 = sbr.rel (0) target = $region13
    $region12: #{linear_layer_forward.1} parent=1 // pred_region
      _
    $region13: #{linear_layer_forward.1} parent=1 // pred_fallthru
      _
    %v15 = vld [vmem:[%s0] sm:$0xff]
    %v16 = vld [vmem:[%s1] sm:$0xff]
    %v17 = vld [vmem:[%s1 + $0x8] sm:$0xff]
    %v18 = vld [vmem:[%s1 + $0x10] sm:$0xff]
    %v19 = vld [vmem:[%s1 + $0x18] sm:$0xff]
    %v20 = vld [vmem:[%s1 + $0x20] sm:$0xff]
    %v21 = vld [vmem:[%s1 + $0x28] sm:$0xff]
    %v22 = vld [vmem:[%s1 + $0x30] sm:$0xff]
    %v23 = vld [vmem:[%s1 + $0x38] sm:$0xff]
    %v24 = vld [vmem:[%s1 + $0x40] sm:$0xff]
    %v25 = vld [vmem:[%s1 + $0x48] sm:$0xff]
    %v26 = vld [vmem:[%s1 + $0x50] sm:$0xff]
    %v27 = vld [vmem:[%s1 + $0x58] sm:$0xff]
    %v28 = vld [vmem:[%s1 + $0x60] sm:$0xff]
    %v29 = vld [vmem:[%s1 + $0x68] sm:$0xff]
    %v30 = vld [vmem:[%s1 + $0x70] sm:$0xff]
    %v31 = vld [vmem:[%s1 + $0x78] sm:$0xff]
    %v32 = vld [vmem:[%s2] sm:$0x1]
    %v34 = vperm.slane %v32, 0
    %36 = vmatpush.xpose.msra.mxu0 %v31
    %37 = vmatpush.xpose.msra.mxu0 %v30
    %38 = vmatpush.xpose.msra.mxu0 %v29
    %39 = vmatpush.xpose.msra.mxu0 %v28
    %40 = vmatpush.xpose.msra.mxu0 %v27
    %41 = vmatpush.xpose.msra.mxu0 %v26
    %42 = vmatpush.xpose.msra.mxu0 %v25
    %43 = vmatpush.xpose.msra.mxu0 %v24
    %44 = vmatpush.xpose.msra.mxu0 %v23
    %45 = vmatpush.xpose.msra.mxu0 %v22
    %46 = vmatpush.xpose.msra.mxu0 %v21
    %47 = vmatpush.xpose.msra.mxu0 %v20
    %48 = vmatpush.xpose.msra.mxu0 %v19
    %49 = vmatpush.xpose.msra.mxu0 %v18
    %50 = vmatpush.xpose.msra.mxu0 %v17
    %51 = vmatpush.xpose.msra.mxu0 %v16
    %52 = vmatmul.f32.gmra.mxu0 %v15
    %v53 = vpop.f32.mrf.mxu0
    %v54 = vadd.f32 %v34, %v53
    %55 = vdwg.mxu0
    %56 = vst [vmem:[#allocation2] sm:$0xff] %v54
    // Predicated region
    $region14: #{linear_layer_forward.1} parent=1 // pred_check
      _
    $region15: #{linear_layer_forward.1} parent=1 // pred_check_branch
      %58 = sbr.rel (0) target = $region17
    $region16: #{linear_layer_forward.1} parent=1 // pred_region
      %60 = vsyncadd [#allocation3], 0
      %s62 = sshll.u32 [#allocation2], 4
      %s63 = int_to_ptr.vmem [resolvable:$true] %s62
      %s64 = sshll.u32 %s3, 4
      %s65 = int_to_ptr.hbm [resolvable:$true] %s64
      %67 = dma.vmem_to_hbm [thread:$0]  %s63, 128, %s65, [#allocation3]
    $region17: #{linear_layer_forward.1} parent=1 // pred_fallthru
      _
    // Predicated region
    $region18: #{linear_layer_forward.1} parent=1 // pred_check
      _
    $region19: #{linear_layer_forward.1} parent=1 // pred_check_branch
      %69 = sbr.rel (0) target = $region21
    $region20: #{linear_layer_forward.1} parent=1 // pred_region
      %71 = dma.done [#allocation3], 128
    $region21: #{linear_layer_forward.1} parent=1 // pred_fallthru
      _
    %72 = vsyncpa [#allocation3], 1

</llo_original>
